<compile_context>
chip_gen: v7x
topology: tpu7x:2x2x1
jax: 0.10.0
libtpu: 0.0.40
codegen_flags: <defaults>
</compile_context>

<pallas_src>
from functools import reduce, partial
import operator
from typing import Iterable, Optional, Tuple, Union

import jax
import jax.numpy as jnp
from jax.experimental import pallas as pl
from jax.experimental.pallas import tpu as pltpu


def prod(iterable):
    return reduce(operator.mul, iterable, 1)


def _round_up(x: int, m: int) -> int:
    return ((x + m - 1) // m) * m


def _choose_tiles(T: int, D: int, N: int,
                  vmem_budget: int = 40 * 1024 * 1024) -> Tuple[int, int]:
    """Pick (tm, tn) so the double-buffered working set fits comfortably in VMEM
    (bounded for v7x's 64 MiB) while keeping tiles as large as possible."""
    tm = min(512, _round_up(T, 8))
    tn = min(1024, _round_up(N, 128))

    def usage(tm_, tn_):
        # x tile (bf16) + V tile (bf16) + bias tile (f32) + out tile (f32),
        # each double-buffered by the BlockSpec pipeline.
        return 2 * (tm_ * D * 2 + D * tn_ * 2 + tn_ * 4 + tm_ * tn_ * 4)

    while tn > 128 and usage(tm, tn) > vmem_budget:
        tn = max(128, ((tn // 2) // 128) * 128)
    while tm > 8 and usage(tm, tn) > vmem_budget:
        tm = max(8, ((tm // 2) // 8) * 8)
    return tm, tn


# ----------------------------- Pallas kernel ------------------------------ #
def _combine_matmul_kernel(x_ref, v_ref, b_ref, o_ref):
    """One (tm, tn) output tile:  out = X @ V + b.

    x_ref: (tm, D)   bf16 text tile
    v_ref: (D,  tn)  bf16 fused user*weight tile (lane axis = flattened u*C+c)
    b_ref: (1,  tn)  f32 bias tile (bias broadcast over users)
    o_ref: (tm, tn)  f32 lane-dense output tile
    """
    acc = jnp.dot(x_ref[...], v_ref[...], preferred_element_type=jnp.float32)
    o_ref[...] = acc + b_ref[...]          # VPU add is free under the MXU


@partial(jax.jit, static_argnames=("compute_dtype",))
def pairwise_combine(text_emb: jnp.ndarray,
                     user_emb: jnp.ndarray,
                     weight: jnp.ndarray,
                     bias: jnp.ndarray,
                     *,
                     compute_dtype=jnp.bfloat16) -> jnp.ndarray:
    """out[t, u, c] = sum_d text[t,d]*user[u,d]*W[d,c] + b[c]  via one Pallas matmul."""
    T, D = text_emb.shape
    U, Du = user_emb.shape
    Dw, C = weight.shape
    assert D == Du == Dw

    N = U * C                                   # fused (user, class) lane axis
    tm, tn = _choose_tiles(T, D, N)
    Tp = _round_up(T, tm)
    Np = _round_up(N, tn)

    # Fused operand V[d, u*C + c] = user[u, d] * W[d, c]   -> (D, U*C)
    # (product in f32 for accuracy, single rounding to bf16 before the MXU).
    v = (user_emb.astype(jnp.float32).T[:, :, None]
         * weight.astype(jnp.float32)[:, None, :]).reshape(D, N)
    b_flat = jnp.tile(bias.astype(jnp.float32), U).reshape(1, N)

    # bf16 operands into the MXU (f32 accumulation); pad to tile multiples.
    x = text_emb.astype(compute_dtype)
    v = v.astype(compute_dtype)
    if Tp != T:
        x = jnp.pad(x, ((0, Tp - T), (0, 0)))
    if Np != N:
        v = jnp.pad(v, ((0, 0), (0, Np - N)))
        b_flat = jnp.pad(b_flat, ((0, 0), (0, Np - N)))

    grid = (Tp // tm, Np // tn)
    itemsize = jnp.dtype(compute_dtype).itemsize
    flops = 2 * Tp * D * Np
    bytes_accessed = (Tp * D * itemsize + D * Np * itemsize
                      + Np * 4 + Tp * Np * 4)

    out = pl.pallas_call(
        _combine_matmul_kernel,
        out_shape=jax.ShapeDtypeStruct((Tp, Np), jnp.float32),
        grid_spec=pltpu.PrefetchScalarGridSpec(
            num_scalar_prefetch=0,
            grid=grid,
            in_specs=[
                pl.BlockSpec((tm, D), lambda i, j: (i, 0)),   # text tile (K = full D)
                pl.BlockSpec((D, tn), lambda i, j: (0, j)),   # fused user*W tile
                pl.BlockSpec((1, tn), lambda i, j: (0, j)),   # bias tile
            ],
            out_specs=pl.BlockSpec((tm, tn), lambda i, j: (i, j)),
        ),
        compiler_params=pltpu.CompilerParams(
            dimension_semantics=("parallel", "parallel"),   # both axes megacore-shardable
            vmem_limit_bytes=48 * 1024 * 1024,              # fits v7x (64 MiB) and v5e/v6e
        ),
        cost_estimate=pl.CostEstimate(flops=flops, transcendentals=0,
                                      bytes_accessed=bytes_accessed),
    )(x, v, b_flat)

    return out[:T, :N].reshape(T, U, C)


# --------------------------- Module-like wrapper --------------------------- #
class PallasCombiner:
    """Concrete realization of CombinerInterface backed by the Pallas kernel."""

    def __init__(self, user_embedding_length: int,
                 output_shape: Union[int, Tuple[int, ...]],
                 key: jax.Array):
        self.user_embedding_length = user_embedding_length
        self.output_shape = output_shape
        c = self.get_out_classes()
        kw, kb = jax.random.split(key)
        # Deterministic parameter init (synthetic; no checkpoint load).
        self.weight = jax.random.normal(kw, (user_embedding_length, c),
                                        dtype=jnp.float32) * 0.05
        self.bias = jax.random.normal(kb, (c,), dtype=jnp.float32) * 0.01

    def get_embedding_in_lengths(self) -> Tuple[Optional[int], int]:
        return (None, self.user_embedding_length)

    def get_out_classes(self) -> int:
        return self.output_shape if isinstance(self.output_shape, int) \
            else prod(self.output_shape)

    def forward(self,
                text_embeddings: Union[jnp.ndarray, Iterable[jnp.ndarray]],
                user_embeddings: jnp.ndarray) -> jnp.ndarray:
        # --- base-class (interface) semantics: normalize + shape assert ---
        if isinstance(text_embeddings, jnp.ndarray):
            text_embeddings = (text_embeddings,)
        else:
            text_embeddings = tuple(text_embeddings)
        ok_lengths = self.get_embedding_in_lengths()
        assert all(t.shape[-1] in ok_lengths
                   for t in (*text_embeddings, user_embeddings)), (
            "Your inputs have an unexpected shape: "
            + " and ".join(str(t.shape) for t in (*text_embeddings, user_embeddings)))

        # Multiple text towers: average their embeddings (all are (#texts, D)).
        text = text_embeddings[0]
        if len(text_embeddings) > 1:
            text = sum(text_embeddings) / float(len(text_embeddings))

        # Operands are cast to bf16 right before the kernel (inside pairwise_combine,
        # which is jitted so the V construction / padding fuse); accumulation is f32.
        out = pairwise_combine(text, user_embeddings, self.weight, self.bias)

        if isinstance(self.output_shape, int):
            final_shape = (text.shape[0], user_embeddings.shape[0], self.output_shape)
        else:
            final_shape = (text.shape[0], user_embeddings.shape[0], *self.output_shape)
        return out.reshape(final_shape)

    __call__ = forward


# --------------------------------- main ----------------------------------- #
if __name__ == "__main__":
    key = jax.random.PRNGKey(0)
    k_text, k_user, k_param = jax.random.split(key, 3)

    T, U, D = 16, 8, 32          # texts, users, embedding length
    output_shape = (2, 3)        # nested multi-task output -> 6 classes total

    text_emb = jax.random.normal(k_text, (T, D), dtype=jnp.float32)
    user_emb = jax.random.normal(k_user, (U, D), dtype=jnp.float32)

    combiner = PallasCombiner(user_embedding_length=D,
                              output_shape=output_shape,
                              key=k_param)

    out = combiner(text_emb, user_emb)
    out = jax.block_until_ready(out)

    # Pure-JAX f32 reference (kernel uses bf16 operands -> loose tolerance).
    ref = jnp.einsum("td,ud,dc->tuc", text_emb, user_emb, combiner.weight) \
        + combiner.bias[None, None, :]
    ref = ref.reshape(T, U, *output_shape)
    assert out.shape == (T, U, *output_shape), out.shape
    assert jnp.allclose(out, ref, atol=2e-2, rtol=2e-2), (
        "mismatch vs reference, max abs err = %g"
        % float(jnp.max(jnp.abs(out - ref))))

    print("KERNEL_OK")
</pallas_src>

<mosaic_0001>
module attributes {stable_mosaic.version = 11 : i64} {
  func.func @_combine_matmul_kernel(%arg0: i32, %arg1: i32, %arg2: memref<16x32xbf16, #tpu.memory_space<vmem>>, %arg3: memref<32x128xbf16, #tpu.memory_space<vmem>>, %arg4: memref<1x128xf32, #tpu.memory_space<vmem>>, %arg5: memref<16x128xf32, #tpu.memory_space<vmem>>) attributes {dimension_semantics = [#tpu.dimension_semantics<parallel>, #tpu.dimension_semantics<parallel>], iteration_bounds = array<i64: 1, 1>, scalar_prefetch = 0 : i64, scratch_operands = 0 : i64, tpu.core_type = #tpu.core_type<tc>, window_params = [{transform_indices = @transform_0, window_bounds = array<i64: 16, 32>}, {transform_indices = @transform_1, window_bounds = array<i64: 32, 128>}, {transform_indices = @transform_2, window_bounds = array<i64: 1, 128>}, {transform_indices = @transform_3, window_bounds = array<i64: 16, 128>}]} {
    %c0 = arith.constant 0 : index
    %c0_0 = arith.constant 0 : index
    %0 = vector.load %arg2[%c0, %c0_0] : memref<16x32xbf16, #tpu.memory_space<vmem>>, vector<16x32xbf16>
    %c0_1 = arith.constant 0 : index
    %c0_2 = arith.constant 0 : index
    %1 = vector.load %arg3[%c0_1, %c0_2] : memref<32x128xbf16, #tpu.memory_space<vmem>>, vector<32x128xbf16>
    %cst = arith.constant dense<0.000000e+00> : vector<16x128xf32>
    %2 = tpu.matmul %0, %1, %cst {dimension_numbers = #tpu.dot_dimension_numbers<[1], [0], [0], [1], [0, 0, 1, 1], [], []>} : vector<16x32xbf16>, vector<32x128xbf16>, vector<16x128xf32> -> vector<16x128xf32>
    %c0_3 = arith.constant 0 : index
    %c0_4 = arith.constant 0 : index
    %3 = vector.load %arg4[%c0_3, %c0_4] : memref<1x128xf32, #tpu.memory_space<vmem>>, vector<1x128xf32>
    %4 = vector.broadcast %3 : vector<1x128xf32> to vector<16x128xf32>
    %5 = arith.addf %2, %4 : vector<16x128xf32>
    %c0_5 = arith.constant 0 : index
    %c0_6 = arith.constant 0 : index
    %6 = vector.load %arg5[%c0_5, %c0_6] : memref<16x128xf32, #tpu.memory_space<vmem>>, vector<16x128xf32>
    tpu.vector_store %arg5[%c0_5, %c0_6], %5 {strides = array<i32>} : memref<16x128xf32, #tpu.memory_space<vmem>>, vector<16x128xf32>,
    return
  }
  func.func @transform_0(%arg0: i32, %arg1: i32) -> (i32, i32) {
    %c0_i32 = arith.constant 0 : i32
    %c0_i32_0 = arith.constant 0 : i32
    return %arg0, %c0_i32 : i32, i32
  }
  func.func @transform_1(%arg0: i32, %arg1: i32) -> (i32, i32) {
    %c0_i32 = arith.constant 0 : i32
    %c0_i32_0 = arith.constant 0 : i32
    return %c0_i32, %arg1 : i32, i32
  }
  func.func @transform_2(%arg0: i32, %arg1: i32) -> (i32, i32) {
    %c0_i32 = arith.constant 0 : i32
    %c0_i32_0 = arith.constant 0 : i32
    return %c0_i32, %arg1 : i32, i32
  }
  func.func @transform_3(%arg0: i32, %arg1: i32) -> (i32, i32) {
    %c0_i32 = arith.constant 0 : i32
    return %arg0, %arg1 : i32, i32
  }
}

</mosaic_0001>

<llo_original>
// kernel: tile.8
$region0: #{tile.8}
  #allocation0 [shape = 's32[1]{0}', space=sflag, size = 0x4, scoped, tag = 'scoped memory for tile.8']
  %s0 = inlined_call_operand.vmem [shape: f32[6], index: 0, kind: input, shape index: {}]
  %s1 = inlined_call_operand.vmem [shape: f32[8,6], index: 1, kind: output, shape index: {}]
  // Predicated region
  $region2: #{tile.8} parent=0 // pred_check
    _
  $region3: #{tile.8} parent=0 // pred_check_branch
    %3 = sbr.rel (0) target = $region5
  $region4: #{tile.8} parent=0 // pred_region
    _
  $region5: #{tile.8} parent=0 // pred_fallthru
    _
  %v4 = vld [vmem:[%s0] ss:$0 sm:$0xff]
  %5 = vst [vmem:[%s1] sm:$0xff] %v4

// kernel: tile.9
$region0: #{tile.9}
  %s0 = inlined_call_operand.vmem [shape: f32[8,6], index: 0, kind: input, shape index: {}]
  %s1 = inlined_call_operand.vmem [shape: f32[1,48], index: 1, kind: output, shape index: {}]
  $region1: #{tile.9} parent=0
    #allocation0 [shape = 'u8[4096]{0}', space=vmem, size = 0x1000, scoped, tag = 'scoped mem for output reshape']
    %v2 = vld [vmem:[%s0] sm:$0x1]
    %vm3 = vcmask 48128
    %4 = vst.msk [vmem:[#allocation0] sm:$0x1] %vm3, %v2
    %s5 = scalar_lea.vmem %s0, 7
    %v6 = vld [vmem:[%s5] sm:$0x1]
    %7 = vrot.lane.b32.xlu0 %v6, 42
    %v8 = vpop.permute.xlu0 %7
    %vm9 = vcmask 392528
    %10 = vst.msk [vmem:[#allocation0] sm:$0x1] %vm9, %v8
    %s11 = scalar_lea.vmem %s0, 6
    %v12 = vld [vmem:[%s11] sm:$0x1]
    %13 = vrot.lane.b32.xlu0 %v12, 36
    %v14 = vpop.permute.xlu0 %13
    %vm15 = vcmask 343328
    %16 = vst.msk [vmem:[#allocation0] sm:$0x1] %vm15, %v14
    %s17 = scalar_lea.vmem %s0, 5
    %v18 = vld [vmem:[%s17] sm:$0x1]
    %19 = vrot.lane.b32.xlu0 %v18, 30
    %v20 = vpop.permute.xlu0 %19
    %vm21 = vcmask 294128
    %22 = vst.msk [vmem:[#allocation0] sm:$0x1] %vm21, %v20
    %s23 = scalar_lea.vmem %s0, 4
    %v24 = vld [vmem:[%s23] sm:$0x1]
    %25 = vrot.lane.b32.xlu0 %v24, 24
    %v26 = vpop.permute.xlu0 %25
    %vm27 = vcmask 244928
    %28 = vst.msk [vmem:[#allocation0] sm:$0x1] %vm27, %v26
    %s29 = scalar_lea.vmem %s0, 3
    %v30 = vld [vmem:[%s29] sm:$0x1]
    %31 = vrot.lane.b32.xlu0 %v30, 18
    %v32 = vpop.permute.xlu0 %31
    %vm33 = vcmask 195728
    %34 = vst.msk [vmem:[#allocation0] sm:$0x1] %vm33, %v32
    %s35 = scalar_lea.vmem %s0, 2
    %v36 = vld [vmem:[%s35] sm:$0x1]
    %37 = vrot.lane.b32.xlu0 %v36, 12
    %v38 = vpop.permute.xlu0 %37
    %vm39 = vcmask 146528
    %40 = vst.msk [vmem:[#allocation0] sm:$0x1] %vm39, %v38
    %s41 = scalar_lea.vmem %s0, 1
    %v42 = vld [vmem:[%s41] sm:$0x1]
    %43 = vrot.lane.b32.xlu0 %v42, 6
    %v44 = vpop.permute.xlu0 %43
    %vm45 = vcmask 97328
    %46 = vst.msk [vmem:[#allocation0] sm:$0x1] %vm45, %v44
    %s48 = sshllo.u32 0, 1
    %v50 = vld [vmem:[#allocation0] sm:%s48]
    %s51 = sshllo.u32 0, 1
    %52 = vst [vmem:[%s1] sm:%s51] %v50

// kernel: pairwise_combine.1
$region0: #{pairwise_combine.1}
  #allocation0 [shape = 'u32[]', space=smem, size = 0x4, offset = 0x4, fixed_abs, tag = 'smem constant byte address 0x4 - core index']
  #allocation1 [shape = 'u32[144,128]{1,0:T(1,128)}', space=vmem, size = 0x12000, scoped, tag = 'internal scratch']
  %s0 = inlined_call_operand.vmem [shape: bf16[16,32], index: 0, kind: input, shape index: {}]
  %s1 = inlined_call_operand.vmem [shape: bf16[32,128], index: 1, kind: input, shape index: {}]
  %s2 = inlined_call_operand.vmem [shape: f32[1,128], index: 2, kind: input, shape index: {}]
  %s3 = inlined_call_operand.vmem [shape: f32[16,128], index: 3, kind: output, shape index: {}]
  %s4 = sld [smem:[#allocation0]]
  $region22: #{pairwise_combine.1} parent=0
    _
  %s6 = ssub.s32 1, %s4
  %s7 = scalar_select 0, %s6, %s4
  // Predicated region
  $region2: #{pairwise_combine.1} parent=0 // pred_check
    _
  $region3: #{pairwise_combine.1} parent=0 // pred_check_branch
    %9 = sbr.rel (0) target = $region5
  $region4: #{pairwise_combine.1} parent=0 // pred_region
    _
  $region5: #{pairwise_combine.1} parent=0 // pred_fallthru
    _
  // Predicated region
  $region6: #{pairwise_combine.1} parent=0 // pred_check
    _
  $region7: #{pairwise_combine.1} parent=0 // pred_check_branch
    %11 = sbr.rel (0) target = $region9
  $region8: #{pairwise_combine.1} parent=0 // pred_region
    _
  $region9: #{pairwise_combine.1} parent=0 // pred_fallthru
    _
  // Predicated region
  $region10: #{pairwise_combine.1} parent=0 // pred_check
    _
  $region11: #{pairwise_combine.1} parent=0 // pred_check_branch
    %13 = sbr.rel (0) target = $region13
  $region12: #{pairwise_combine.1} parent=0 // pred_region
    _
  $region13: #{pairwise_combine.1} parent=0 // pred_fallthru
    _
  %v15 = vld [vmem:[%s0] sm:$0xf]
  %v16 = vld [vmem:[%s0 + $0x4] sm:$0xf]
  %v17 = vld [vmem:[%s1] sm:$0xf]
  %v18 = vld [vmem:[%s1 + $0x4] sm:$0xf]
  %v19 = vld [vmem:[%s1 + $0x8] sm:$0xf]
  %v20 = vld [vmem:[%s1 + $0xc] sm:$0xf]
  %v21 = vld [vmem:[%s2] sm:$0x1]
  %v23 = vlaneseq
  %v24 = vshrl.u32 %v23, 7
  %v25 = vsub.s32 0, %v24
  %v26 = vrot.slane %v21, %v25
  %v30 = vunpack.c.l.b16 %v15
  %v31 = vunpack.c.l.b16 %v16
  %v32 = vpack.c.b16 %v31, %v30
  %v37 = vunpack.c.l.b16 %v17
  %v38 = vunpack.c.l.b16 %v18
  %v39 = vunpack.c.l.b16 %v19
  %v40 = vunpack.c.l.b16 %v20
  %v41 = vpack.c.b16 %v38, %v37
  %v42 = vpack.c.b16 %v40, %v39
  %vm45 = vcmask 261120
  %v47 = vsel %vm45, %v32, 0
  %49 = vmatprep.subr.bf16.mxu0 0
  %50 = vmatpush1.bf16.msra.mxu0 %v41
  %51 = vmatprep.subr.bf16.mxu0 0
  %52 = vmatpush1.bf16.msra.mxu0 %v42
  %53 = vmatprep.subr.bf16.mxu0 0
  %54 = vmatpush1.bf16.msra.mxu0 0
  %55 = vmatprep.subr.bf16.mxu0 0
  %56 = vmatpush1.bf16.msra.mxu0 0
  %57 = vmatprep.subr.bf16.mxu0 0
  %58 = vmatpush1.bf16.msra.mxu0 0
  %59 = vmatprep.subr.bf16.mxu0 0
  %60 = vmatpush1.bf16.msra.mxu0 0
  %61 = vmatprep.subr.bf16.mxu0 0
  %62 = vmatpush1.bf16.msra.mxu0 0
  %63 = vmatprep.subr.bf16.mxu0 0
  %64 = vmatpush1.bf16.msra.mxu0 0
  %65 = vmatprep.subr.bf16.mxu0 0
  %66 = vmatpush1.bf16.msra.mxu0 0
  %67 = vmatprep.subr.bf16.mxu0 0
  %68 = vmatpush1.bf16.msra.mxu0 0
  %69 = vmatprep.subr.bf16.mxu0 0
  %70 = vmatpush1.bf16.msra.mxu0 0
  %71 = vmatprep.subr.bf16.mxu0 0
  %72 = vmatpush1.bf16.msra.mxu0 0
  %73 = vmatprep.subr.bf16.mxu0 0
  %74 = vmatpush1.bf16.msra.mxu0 0
  %75 = vmatprep.subr.bf16.mxu0 0
  %76 = vmatpush1.bf16.msra.mxu0 0
  %77 = vmatprep.subr.bf16.mxu0 0
  %78 = vmatpush1.bf16.msra.mxu0 0
  %79 = vmatprep.subr.bf16.mxu0 0
  %80 = vmatpush1.bf16.msra.mxu0 0
  %81 = vmatprep.mubr.bf16.mxu0 0
  %82 = vmatmul.mubr.bf16.gmra.mrb[0].mxu0 %v47
  %v83 = vpop.f32.mrb[0].mxu0
  %v84 = vadd.f32 %v26, %v83
  %v85 = vpop.f32.mrb[0].mxu0
  %v86 = vpop.f32.mrb[0].mxu0
  %v87 = vadd.f32 %v26, %v86
  %v88 = vpop.f32.mrb[0].mxu0
  %89 = vdwg.mxu0
  %90 = vst [vmem:[%s3] sm:$0xff] %v84
  %91 = vst [vmem:[%s3 + $0x8] sm:$0xff] %v87
  // Predicated region
  $region14: #{pairwise_combine.1} parent=0 // pred_check
    _
  $region15: #{pairwise_combine.1} parent=0 // pred_check_branch
    %93 = sbr.rel (0) target = $region17
  $region16: #{pairwise_combine.1} parent=0 // pred_region
    _
  $region17: #{pairwise_combine.1} parent=0 // pred_fallthru
    _
  // Predicated region
  $region18: #{pairwise_combine.1} parent=0 // pred_check
    _
  $region19: #{pairwise_combine.1} parent=0 // pred_check_branch
    %95 = sbr.rel (0) target = $region21
  $region20: #{pairwise_combine.1} parent=0 // pred_region
    _
  $region21: #{pairwise_combine.1} parent=0 // pred_fallthru
    _

</llo_original>
